<compile_context>
chip_gen: v5e
topology: v5e:2x2
jax: 0.10.0
libtpu: 0.0.40
codegen_flags: <defaults>
</compile_context>

<pallas_src>
import math
from functools import partial

import jax
import jax.numpy as jnp
from jax import lax
from jax.experimental import pallas as pl
from jax.experimental.pallas import tpu as pltpu

_NEG_MASK = -1e30   # "fully masked" value for user masks (finite, clamp point)
_NEG_PAD = -3e38    # kv-padding value; strictly below _NEG_MASK so padded
                    # columns never survive softmax, even on fully-masked rows


def _round_up(x, m):
    return ((x + m - 1) // m) * m


def _vmem_limit_bytes():
    """Generation-aware VMEM budget: ~75% of per-core VMEM, fallback 48 MiB."""
    try:
        cap = getattr(pltpu.get_tpu_info(), "vmem_capacity_bytes", None)
        if cap:
            return int(cap) * 3 // 4
    except Exception:
        pass
    return 48 * 1024 * 1024


def _choose_tiles(B, T, D, tq_target, tk_target):
    """Pick (tq, tk, tt, T_pad) with tk a multiple of 128, tq | tk, tt | T_pad."""
    # Bound per-step VMEM for very large embedding dims (v7x: 64 MiB / core).
    if D >= 2048:
        tk_target = min(tk_target, 256)
    elif D >= 1024:
        tk_target = min(tk_target, 512)

    tk_max = max(128, _round_up(min(tk_target, T), 128))
    tk = 128
    for cand in range(128, tk_max + 1, 128):
        if _round_up(T, cand) - T <= max(128, T // 16):   # <=~6% padding waste
            tk = cand

    tq = tk
    for cand in (512, 256, 128, 64, 32, 16, 8):
        if cand <= max(tq_target, 8) and tk % cand == 0:
            tq = cand
            break

    T_pad = _round_up(T, tk)

    # v7x has 2 TensorCores: make sure the 'parallel' axes have >= 2 programs.
    while (B * (T_pad // tq) < 2 and tq >= 16
           and (tq // 2) % 8 == 0 and T_pad % (tq // 2) == 0):
        tq //= 2

    tt = tk
    if tk > 512 and T_pad % 512 == 0:
        tt = 512
    return tq, tk, tt, T_pad


# ---------------------------------------------------------------------------
# Kernel 1: fused QKV projection (scale pre-folded into the Q weight columns).
# Writes q/k/v as separate (B, T, D) arrays -> no XLA transpose afterwards.
# ---------------------------------------------------------------------------
def _qkv_proj_kernel(x_ref, w_ref, q_ref, k_ref, v_ref, *, D):
    # x_ref: (1, tt, D), w_ref: (D, 3D) resident, outputs: (1, tt, D) each.
    qkv = jnp.dot(x_ref[0], w_ref[...], preferred_element_type=jnp.float32)
    q_ref[0] = qkv[:, :D].astype(q_ref.dtype)
    k_ref[0] = qkv[:, D:2 * D].astype(k_ref.dtype)
    v_ref[0] = qkv[:, 2 * D:].astype(v_ref.dtype)


# ---------------------------------------------------------------------------
# Kernel 2: flash attention over kv tiles, all heads per grid step, fused c_proj.
# Grid: (B, q_tiles, kv_tiles); kv axis is the reduction ("arbitrary").
# ---------------------------------------------------------------------------
def _make_attn_kernel(*, H, hd, T, tk, kv_padded, has_mask, mask_is_bool,
                      mask_per_head):
    def body(q_ref, k_ref, v_ref, wp_ref, mask_ref, o_ref, m_sc, l_sc, acc_sc):
        ki = pl.program_id(2)
        nk = pl.num_programs(2)

        @pl.when(ki == 0)
        def _init():
            m_sc[...] = jnp.full(m_sc.shape, -jnp.inf, m_sc.dtype)
            l_sc[...] = jnp.zeros(l_sc.shape, l_sc.dtype)
            acc_sc[...] = jnp.zeros(acc_sc.shape, acc_sc.dtype)

        # Validity of kv columns in the (possibly padded) last tile.
        valid = None
        if kv_padded:
            col = lax.broadcasted_iota(jnp.int32, (1, tk), 1)
            valid = col < (T - ki * tk)

        # Head-broadcast masks: load/convert once per grid step, reuse per head.
        keep0 = None
        madd0 = None
        if has_mask and not mask_per_head:
            if mask_is_bool:
                keep0 = mask_ref[0, 0].astype(jnp.int32) != 0
            else:
                madd0 = mask_ref[0, 0].astype(jnp.float32)

        for h in range(H):  # static unroll: all heads share this step's tiles
            lo, hi = h * hd, (h + 1) * hd
            qh = q_ref[0, :, lo:hi]            # (tq, hd) -- scale already folded
            kh = k_ref[0, :, lo:hi]            # (tk, hd)
            vh = v_ref[0, :, lo:hi]            # (tk, hd)

            # NT contraction on the MXU (no explicit K transpose).
            s = lax.dot_general(qh, kh, (((1,), (1,)), ((), ())),
                                preferred_element_type=jnp.float32)  # (tq, tk)
            if has_mask:
                if mask_is_bool:
                    keep = (mask_ref[0, h].astype(jnp.int32) != 0) \
                        if mask_per_head else keep0
                    s = jnp.where(keep, s, _NEG_MASK)
                else:
                    madd = (mask_ref[0, h].astype(jnp.float32)
                            if mask_per_head else madd0)
                    s = s + madd
            if valid is not None:
                s = jnp.where(valid, s, _NEG_PAD)

            m_prev = m_sc[h]
            m_new = jnp.maximum(m_prev, jnp.max(s, axis=-1, keepdims=True))
            alpha = jnp.exp(m_prev - m_new)
            p = jnp.exp(s - m_new)                       # f32 on the EUP
            l_sc[h] = alpha * l_sc[h] + jnp.sum(p, axis=-1, keepdims=True)
            acc_sc[h] = alpha * acc_sc[h] + jnp.dot(
                p.astype(vh.dtype), vh, preferred_element_type=jnp.float32)
            m_sc[h] = m_new

        @pl.when(ki == nk - 1)
        def _finalize():
            # Normalize each head's accumulator, concatenate to (tq, D) and do a
            # single full-contraction c_proj matmul (best MXU fill for the fold).
            pieces = [acc_sc[h] * pl.reciprocal(l_sc[h], approx=True)
                      for h in range(H)]
            y = jnp.concatenate(pieces, axis=-1).astype(wp_ref.dtype)  # (tq, D)
            o_ref[0] = jnp.dot(y, wp_ref[...],
                               preferred_element_type=jnp.float32
                               ).astype(o_ref.dtype)

    if has_mask:
        def kernel(q_ref, k_ref, v_ref, wp_ref, mask_ref, o_ref,
                   m_sc, l_sc, acc_sc):
            body(q_ref, k_ref, v_ref, wp_ref, mask_ref, o_ref, m_sc, l_sc, acc_sc)
    else:
        def kernel(q_ref, k_ref, v_ref, wp_ref, o_ref, m_sc, l_sc, acc_sc):
            body(q_ref, k_ref, v_ref, wp_ref, None, o_ref, m_sc, l_sc, acc_sc)
    return kernel


def attention_forward(x, w_attn, w_proj, n_heads, mask=None, compute_dtype=None,
                      tq_target=256, tk_target=1024):
    """Forward of the PyTorch `Attention` module (eval mode, bias-free Linears).

    x:      (B, T, D)
    w_attn: (3D, D)  torch nn.Linear layout (c_attn.weight)
    w_proj: (D, D)   torch nn.Linear layout (c_proj.weight)
    mask:   optional additive (float) or boolean mask broadcastable to
            (B, n_heads, T, T); kept bf16 / int8 in HBM, never expanded over B/H.
    """
    B, T, D = x.shape
    assert D % n_heads == 0
    H = n_heads
    hd = D // H

    # MXU operands default to bf16 (native MXU rate); accumulation is always f32.
    if compute_dtype is not None:
        cd = compute_dtype
    elif x.dtype == jnp.float32:
        cd = jnp.bfloat16
    else:
        cd = x.dtype

    scale = 1.0 / math.sqrt(hd)
    vmem_limit = _vmem_limit_bytes()
    tq, tk, tt, T_pad = _choose_tiles(B, T, D, tq_target, tk_target)

    # ---- host-side weight prep (free, outside the hot path) ----------------
    wq_t = jnp.transpose(w_attn[:D]) * scale                      # (D, D) scaled
    wkv_t = jnp.transpose(w_attn[D:])                             # (D, 2D)
    wqkv_t = jnp.concatenate([wq_t, wkv_t], axis=1).astype(cd)    # (D, 3D)
    wproj_t = jnp.transpose(w_proj).astype(cd)                    # (D, D)

    x_c = x.astype(cd)
    if T_pad > T:
        x_c = jnp.pad(x_c, ((0, 0), (0, T_pad - T), (0, 0)))

    # ---- kernel 1: fused QKV projection -------------------------------------
    q, k, v = pl.pallas_call(
        partial(_qkv_proj_kernel, D=D),
        out_shape=(jax.ShapeDtypeStruct((B, T_pad, D), cd),
                   jax.ShapeDtypeStruct((B, T_pad, D), cd),
                   jax.ShapeDtypeStruct((B, T_pad, D), cd)),
        grid_spec=pltpu.PrefetchScalarGridSpec(
            num_scalar_prefetch=0,
            grid=(B, T_pad // tt),
            in_specs=[
                pl.BlockSpec((1, tt, D), lambda b, t: (b, t, 0)),
                pl.BlockSpec((D, 3 * D), lambda b, t: (0, 0)),  # constant -> resident
            ],
            out_specs=[
                pl.BlockSpec((1, tt, D), lambda b, t: (b, t, 0)),
                pl.BlockSpec((1, tt, D), lambda b, t: (b, t, 0)),
                pl.BlockSpec((1, tt, D), lambda b, t: (b, t, 0)),
            ],
        ),
        compiler_params=pltpu.CompilerParams(
            dimension_semantics=("parallel", "parallel"),
            vmem_limit_bytes=vmem_limit,
        ),
    )(x_c, wqkv_t)

    # ---- mask normalization: small dtype in HBM, B/H broadcast in index_map --
    mask_in = None
    mask_is_bool = False
    mask_per_head = False
    mask_per_batch = False
    if mask is not None:
        m = jnp.asarray(mask)
        if m.dtype == jnp.bool_:
            mask_is_bool = True
            m = m.astype(jnp.int8)                                # 1 byte/elem
        else:
            m = jnp.maximum(m.astype(jnp.float32), _NEG_MASK).astype(jnp.bfloat16)
        while m.ndim < 4:
            m = m[None]
        Bm, Hm = m.shape[0], m.shape[1]
        assert Bm in (1, B) and Hm in (1, H), "mask must broadcast to (B,H,T,T)"
        m = jnp.broadcast_to(m, (Bm, Hm, T, T))   # only T dims expanded
        if T_pad > T:
            m = jnp.pad(m, ((0, 0), (0, 0), (0, T_pad - T), (0, T_pad - T)))
        mask_in = m
        mask_per_head = Hm > 1
        mask_per_batch = Bm > 1

    # ---- kernel 2: flash attention + fused output projection ---------------
    nq, nk = T_pad // tq, T_pad // tk
    kernel = _make_attn_kernel(H=H, hd=hd, T=T, tk=tk, kv_padded=(T_pad > T),
                               has_mask=mask_in is not None,
                               mask_is_bool=mask_is_bool,
                               mask_per_head=mask_per_head)

    in_specs = [
        pl.BlockSpec((1, tq, D), lambda b, qi, ki: (b, qi, 0)),  # q (resident over ki)
        pl.BlockSpec((1, tk, D), lambda b, qi, ki: (b, ki, 0)),  # k
        pl.BlockSpec((1, tk, D), lambda b, qi, ki: (b, ki, 0)),  # v
        pl.BlockSpec((D, D), lambda b, qi, ki: (0, 0)),          # W_proj^T resident
    ]
    inputs = [q, k, v, wproj_t]
    if mask_in is not None:
        Hm_blk = H if mask_per_head else 1
        bsel = mask_per_batch
        in_specs.append(pl.BlockSpec(
            (1, Hm_blk, tq, tk),
            lambda b, qi, ki, _b=bsel: ((b if _b else 0), 0, qi, ki)))
        inputs.append(mask_in)

    out = pl.pallas_call(
        kernel,
        out_shape=jax.ShapeDtypeStruct((B, T_pad, D), x.dtype),
        grid_spec=pltpu.PrefetchScalarGridSpec(
            num_scalar_prefetch=0,
            grid=(B, nq, nk),
            in_specs=in_specs,
            out_specs=pl.BlockSpec((1, tq, D), lambda b, qi, ki: (b, qi, 0)),
            scratch_shapes=[
                pltpu.VMEM((H, tq, 1), jnp.float32),    # running row max / head
                pltpu.VMEM((H, tq, 1), jnp.float32),    # running denominator / head
                pltpu.VMEM((H, tq, hd), jnp.float32),   # per-head output accumulator
            ],
        ),
        compiler_params=pltpu.CompilerParams(
            dimension_semantics=("parallel", "parallel", "arbitrary"),
            vmem_limit_bytes=vmem_limit,
        ),
    )(*inputs)

    if T_pad > T:
        out = out[:, :T]
    return out


def _reference(x, w_attn, w_proj, n_heads, mask=None):
    """Pure-JAX reference mirroring the PyTorch forward (eval mode)."""
    B, T, D = x.shape
    hd = D // n_heads
    hp = lax.Precision.HIGHEST
    qkv = jnp.einsum("btd,ed->bte", x, w_attn, precision=hp)
    q, k, v = jnp.split(qkv, 3, axis=-1)

    def heads(t):  # (B, T, D) -> (B, H, T, hd)
        return jnp.transpose(t.reshape(B, T, n_heads, hd), (0, 2, 1, 3))

    q, k, v = heads(q), heads(k), heads(v)
    s = jnp.einsum("bhtd,bhsd->bhts", q, k, precision=hp) / math.sqrt(hd)
    if mask is not None:
        mask = jnp.asarray(mask)
        if mask.dtype == jnp.bool_:
            s = jnp.where(mask, s, _NEG_MASK)
        else:
            s = s + mask
    p = jax.nn.softmax(s, axis=-1)
    y = jnp.einsum("bhts,bhsd->bhtd", p, v, precision=hp)
    y = jnp.transpose(y, (0, 2, 1, 3)).reshape(B, T, D)
    return jnp.einsum("btd,ed->bte", y, w_proj, precision=hp)


if __name__ == "__main__":
    key = jax.random.PRNGKey(0)
    kx, kw1, kw2, km1, km2 = jax.random.split(key, 5)

    # --- case 1: tiny shape (exercises the padded single-tile path) ---------
    B, T, D, H = 2, 8, 32, 4
    x = jax.random.normal(kx, (B, T, D), dtype=jnp.float32)
    w_attn = jax.random.normal(kw1, (3 * D, D), dtype=jnp.float32) / math.sqrt(D)
    w_proj = jax.random.normal(kw2, (D, D), dtype=jnp.float32) / math.sqrt(D)
    ref = _reference(x, w_attn, w_proj, H)

    # f32 compute path
    out = jax.block_until_ready(
        attention_forward(x, w_attn, w_proj, H, compute_dtype=jnp.float32))
    assert out.shape == (B, T, D)
    assert jnp.allclose(out, ref, atol=2e-2, rtol=2e-2), "f32 no-mask mismatch"

    # default bf16 compute path (MXU-native operands, f32 accumulation)
    out_bf = jax.block_until_ready(attention_forward(x, w_attn, w_proj, H))
    assert jnp.allclose(out_bf, ref, atol=8e-2, rtol=8e-2), "bf16 no-mask mismatch"

    # additive float mask (kept bf16 in HBM), broadcast over batch and heads
    mask_add = jax.random.normal(km1, (1, 1, T, T), dtype=jnp.float32)
    out_m = jax.block_until_ready(
        attention_forward(x, w_attn, w_proj, H, mask=mask_add,
                          compute_dtype=jnp.float32))
    ref_m = _reference(x, w_attn, w_proj, H, mask=mask_add)
    assert jnp.allclose(out_m, ref_m, atol=3e-2, rtol=3e-2), "float-mask mismatch"

    # boolean mask (kept int8 in HBM), per-batch broadcast over heads
    mask_b = jax.random.bernoulli(km2, 0.7, (B, 1, T, T))
    out_b = jax.block_until_ready(
        attention_forward(x, w_attn, w_proj, H, mask=mask_b,
                          compute_dtype=jnp.float32))
    ref_b = _reference(x, w_attn, w_proj, H, mask=mask_b)
    assert jnp.allclose(out_b, ref_b, atol=2e-2, rtol=2e-2), "bool-mask mismatch"

    # --- case 2: multi-tile flash path (nq = nk = 2, no padding) ------------
    B2, T2, D2, H2 = 1, 256, 64, 4
    k2 = jax.random.split(kx, 3)
    x2 = jax.random.normal(k2[0], (B2, T2, D2), dtype=jnp.float32)
    wa2 = jax.random.normal(k2[1], (3 * D2, D2), dtype=jnp.float32) / math.sqrt(D2)
    wp2 = jax.random.normal(k2[2], (D2, D2), dtype=jnp.float32) / math.sqrt(D2)
    out2 = jax.block_until_ready(
        attention_forward(x2, wa2, wp2, H2, compute_dtype=jnp.float32,
                          tq_target=128, tk_target=128))
    ref2 = _reference(x2, wa2, wp2, H2)
    assert jnp.allclose(out2, ref2, atol=2e-2, rtol=2e-2), "multi-tile mismatch"

    print("KERNEL_OK")
</pallas_src>

<mosaic_0001>
module attributes {stable_mosaic.version = 11 : i64} {
  func.func @_qkv_proj_kernel(%arg0: i32, %arg1: i32, %arg2: memref<1x128x32xf32, #tpu.memory_space<vmem>>, %arg3: memref<32x96xf32, #tpu.memory_space<vmem>>, %arg4: memref<1x128x32xf32, #tpu.memory_space<vmem>>, %arg5: memref<1x128x32xf32, #tpu.memory_space<vmem>>, %arg6: memref<1x128x32xf32, #tpu.memory_space<vmem>>) attributes {dimension_semantics = [#tpu.dimension_semantics<parallel>, #tpu.dimension_semantics<parallel>], iteration_bounds = array<i64: 2, 1>, scalar_prefetch = 0 : i64, scratch_operands = 0 : i64, tpu.core_type = #tpu.core_type<tc>, window_params = [{transform_indices = @transform_0, window_bounds = array<i64: 1, 128, 32>}, {pipeline_mode = #tpu.pipeline_mode<synchronous>, transform_indices = @transform_1, window_bounds = array<i64: 32, 96>}, {transform_indices = @transform_2, window_bounds = array<i64: 1, 128, 32>}, {transform_indices = @transform_3, window_bounds = array<i64: 1, 128, 32>}, {transform_indices = @transform_4, window_bounds = array<i64: 1, 128, 32>}]} {
    %c0 = arith.constant 0 : index
    %c0_0 = arith.constant 0 : index
    %c0_1 = arith.constant 0 : index
    %0 = vector.load %arg2[%c0, %c0_0, %c0_1] : memref<1x128x32xf32, #tpu.memory_space<vmem>>, vector<1x128x32xf32>
    %1 = vector.shape_cast %0 : vector<1x128x32xf32> to vector<128x32xf32>
    %c0_2 = arith.constant 0 : index
    %c0_3 = arith.constant 0 : index
    %2 = vector.load %arg3[%c0_2, %c0_3] : memref<32x96xf32, #tpu.memory_space<vmem>>, vector<32x96xf32>
    %cst = arith.constant dense<0.000000e+00> : vector<128x96xf32>
    %3 = tpu.matmul %1, %2, %cst {dimension_numbers = #tpu.dot_dimension_numbers<[1], [0], [0], [1], [0, 0, 1, 1], [], []>} : vector<128x32xf32>, vector<32x96xf32>, vector<128x96xf32> -> vector<128x96xf32>
    %4 = vector.extract_strided_slice %3 {offsets = [0, 0], sizes = [128, 32], strides = [1, 1]} : vector<128x96xf32> to vector<128x32xf32>
    %c0_4 = arith.constant 0 : index
    %c0_5 = arith.constant 0 : index
    %c0_6 = arith.constant 0 : index
    %5 = vector.load %arg4[%c0_4, %c0_5, %c0_6] : memref<1x128x32xf32, #tpu.memory_space<vmem>>, vector<1x128x32xf32>
    %6 = vector.shape_cast %5 : vector<1x128x32xf32> to vector<128x32xf32>
    %7 = vector.shape_cast %4 : vector<128x32xf32> to vector<1x128x32xf32>
    tpu.vector_store %arg4[%c0_4, %c0_5, %c0_6], %7 {strides = array<i32>} : memref<1x128x32xf32, #tpu.memory_space<vmem>>, vector<1x128x32xf32>,
    %8 = vector.extract_strided_slice %3 {offsets = [0, 32], sizes = [128, 32], strides = [1, 1]} : vector<128x96xf32> to vector<128x32xf32>
    %c0_7 = arith.constant 0 : index
    %c0_8 = arith.constant 0 : index
    %c0_9 = arith.constant 0 : index
    %9 = vector.load %arg5[%c0_7, %c0_8, %c0_9] : memref<1x128x32xf32, #tpu.memory_space<vmem>>, vector<1x128x32xf32>
    %10 = vector.shape_cast %9 : vector<1x128x32xf32> to vector<128x32xf32>
    %11 = vector.shape_cast %8 : vector<128x32xf32> to vector<1x128x32xf32>
    tpu.vector_store %arg5[%c0_7, %c0_8, %c0_9], %11 {strides = array<i32>} : memref<1x128x32xf32, #tpu.memory_space<vmem>>, vector<1x128x32xf32>,
    %12 = vector.extract_strided_slice %3 {offsets = [0, 64], sizes = [128, 32], strides = [1, 1]} : vector<128x96xf32> to vector<128x32xf32>
    %c0_10 = arith.constant 0 : index
    %c0_11 = arith.constant 0 : index
    %c0_12 = arith.constant 0 : index
    %13 = vector.load %arg6[%c0_10, %c0_11, %c0_12] : memref<1x128x32xf32, #tpu.memory_space<vmem>>, vector<1x128x32xf32>
    %14 = vector.shape_cast %13 : vector<1x128x32xf32> to vector<128x32xf32>
    %15 = vector.shape_cast %12 : vector<128x32xf32> to vector<1x128x32xf32>
    tpu.vector_store %arg6[%c0_10, %c0_11, %c0_12], %15 {strides = array<i32>} : memref<1x128x32xf32, #tpu.memory_space<vmem>>, vector<1x128x32xf32>,
    return
  }
  func.func @transform_0(%arg0: i32, %arg1: i32) -> (i32, i32, i32) {
    %c0_i32 = arith.constant 0 : i32
    %c0_i32_0 = arith.constant 0 : i32
    return %arg0, %arg1, %c0_i32 : i32, i32, i32
  }
  func.func @transform_1(%arg0: i32, %arg1: i32) -> (i32, i32) {
    %c0_i32 = arith.constant 0 : i32
    %c0_i32_0 = arith.constant 0 : i32
    %c0_i32_1 = arith.constant 0 : i32
    return %c0_i32, %c0_i32_0 : i32, i32
  }
  func.func @transform_2(%arg0: i32, %arg1: i32) -> (i32, i32, i32) {
    %c0_i32 = arith.constant 0 : i32
    %c0_i32_0 = arith.constant 0 : i32
    return %arg0, %arg1, %c0_i32 : i32, i32, i32
  }
  func.func @transform_3(%arg0: i32, %arg1: i32) -> (i32, i32, i32) {
    %c0_i32 = arith.constant 0 : i32
    %c0_i32_0 = arith.constant 0 : i32
    return %arg0, %arg1, %c0_i32 : i32, i32, i32
  }
  func.func @transform_4(%arg0: i32, %arg1: i32) -> (i32, i32, i32) {
    %c0_i32 = arith.constant 0 : i32
    %c0_i32_0 = arith.constant 0 : i32
    return %arg0, %arg1, %c0_i32 : i32, i32, i32
  }
}

</mosaic_0001>

<llo_original>
// kernel: tpu_custom_call.1
$region0: #{tpu_custom_call.1}
  #allocation0 [shape = 'u32[]', space=smem, size = 0x4, offset = 0x4, fixed_abs, tag = 'smem constant byte address 0x4 - core index']
  #allocation1 [shape = 'u32[72,128]{1,0:T(1,128)}', space=vmem, size = 0x9000, scoped, tag = 'internal scratch']
  %s0 = inlined_call_operand.vmem [shape: f32[2,128,32], index: 0, kind: input, shape index: {}]
  %s1 = inlined_call_operand.vmem [shape: f32[32,96], index: 1, kind: input, shape index: {}]
  %s2 = inlined_call_operand.vmem [shape: f32[2,128,32], index: 2, kind: output, shape index: {0}]
  %s3 = inlined_call_operand.vmem [shape: f32[2,128,32], index: 3, kind: output, shape index: {1}]
  %s4 = inlined_call_operand.vmem [shape: f32[2,128,32], index: 4, kind: output, shape index: {2}]
  %5 = xla_tuple %s2, %s3, %s4
  %s6 = sld [smem:[#allocation0]]
  $region57: #{tpu_custom_call.1} parent=0
    _
  %s8 = ssub.s32 1, %s6
  %s9 = scalar_select 0, %s8, %s6
  loop: start=0, step=1, limit=4
  $region2: #{tpu_custom_call.1} parent=0 // loop_pre_header
    _
  $region3: #{tpu_custom_call.1} parent=0 // loop_header
    %s11 = sphi 0, %s15
    %p12 = scmp.ge.s32.totalorder %s11, 4
    %s18 = sphi 0, %s30
    %s19 = sphi 0, %s26
    %s20 = sphi 0, %s18
    %s21 = sphi 0, %s19
    %s22 = sphi 0, %s20
    %s23 = sphi 0, %s21
    %s35 = sphi 0, %s37
    %s38 = sphi 0, %s35
    %s39 = sphi 0, %s38
    %s55 = sphi 0, %s39
    %s59 = sphi 0, %s59
    %s61 = sphi 0, %s59
    %s62 = sphi 0, %s61
    %s76 = sphi 0, %s62
    %s84 = sphi 0, %s86
    %s87 = sphi 0, %s84
    %s88 = sphi 0, %s87
    %s104 = sphi 0, %s88
    %s112 = sphi 0, %s114
    %s115 = sphi 0, %s112
    %s116 = sphi 0, %s115
    %s132 = sphi 0, %s116
    %s140 = sphi 0, %s142
    %s143 = sphi 0, %s140
    %s144 = sphi 0, %s143
    %s160 = sphi 0, %s144
  $region4: #{tpu_custom_call.1} parent=0 // loop_header_branch
    %14 = sbr.rel (%p12) target = $region8
  $region5: #{tpu_custom_call.1} parent=0 // loop_body
    %s16 = ssub.s32 %s11, 1
    %s17 = ssub.s32 %s11, 2
    %s24 = sadd.s32 1, %s19
    %p25 = scmp.ge.s32.totalorder %s24, 1
    %s26 = scalar_select %p25, 0, %s24
    %s27 = sadd.s32 1, %s18
    %s28 = scalar_select %p25, %s27, %s18
    %p29 = scmp.ge.s32.totalorder %s28, 2
    %s30 = scalar_select %p29, 0, %s28
    %s31 = ssub.s32 %s18, %s30
    %s32 = ssub.s32 %s19, %s26
    %s33 = sor.u32 %s31, %s32
    %p34 = scmp.eq.s32.totalorder %s33, 0
    %s36 = sadd.s32 %s35, 1
    %s37 = scalar_select %p34, %s35, %s36
    %p40 = pneg %p34
    %p41 = scmp.eq.s32.totalorder %s11, 1
    %p42 = por %p40, %p41
    %p43 = scmp.ne.s32.totalorder %s35, %s38
    %p44 = scmp.eq.s32.totalorder %s11, 0
    %p45 = por %p43, %p44
    %p46 = scmp.ne.s32.totalorder %s35, %s38
    %p47 = scmp.eq.s32.totalorder %s16, 1
    %p48 = por %p46, %p47
    %p49 = scmp.ne.s32.totalorder %s38, %s39
    %p50 = scmp.eq.s32.totalorder %s16, 0
    %p51 = por %p49, %p50
    %p52 = scmp.ne.s32.totalorder %s38, %s39
    %p53 = scmp.eq.s32.totalorder %s17, 1
    %p54 = por %p52, %p53
    %p56 = scmp.ne.s32.totalorder %s39, %s55
    %p57 = scmp.eq.s32.totalorder %s17, 0
    %p58 = por %p56, %p57
    %s60 = sadd.s32 %s59, 1
    %p63 = scmp.eq.s32.totalorder %s11, 1
    %p64 = scmp.ne.s32.totalorder %s59, %s61
    %p65 = scmp.eq.s32.totalorder %s11, 0
    %p66 = por %p64, %p65
    %p67 = scmp.ne.s32.totalorder %s59, %s61
    %p68 = scmp.eq.s32.totalorder %s16, 1
    %p69 = por %p67, %p68
    %p70 = scmp.ne.s32.totalorder %s61, %s62
    %p71 = scmp.eq.s32.totalorder %s16, 0
    %p72 = por %p70, %p71
    %p73 = scmp.ne.s32.totalorder %s61, %s62
    %p74 = scmp.eq.s32.totalorder %s17, 1
    %p75 = por %p73, %p74
    %p77 = scmp.ne.s32.totalorder %s62, %s76
    %p78 = scmp.eq.s32.totalorder %s17, 0
    %p79 = por %p77, %p78
    %s80 = ssub.s32 %s18, %s30
    %s81 = ssub.s32 %s19, %s26
    %s82 = sor.u32 %s80, %s81
    %p83 = scmp.eq.s32.totalorder %s82, 0
    %s85 = sadd.s32 %s84, 1
    %s86 = scalar_select %p83, %s84, %s85
    %p89 = pneg %p83
    %p90 = scmp.eq.s32.totalorder %s11, 1
    %p91 = por %p89, %p90
    %p92 = scmp.ne.s32.totalorder %s84, %s87
    %p93 = scmp.eq.s32.totalorder %s11, 0
    %p94 = por %p92, %p93
    %p95 = scmp.ne.s32.totalorder %s84, %s87
    %p96 = scmp.eq.s32.totalorder %s16, 1
    %p97 = por %p95, %p96
    %p98 = scmp.ne.s32.totalorder %s87, %s88
    %p99 = scmp.eq.s32.totalorder %s16, 0
    %p100 = por %p98, %p99
    %p101 = scmp.ne.s32.totalorder %s87, %s88
    %p102 = scmp.eq.s32.totalorder %s17, 1
    %p103 = por %p101, %p102
    %p105 = scmp.ne.s32.totalorder %s88, %s104
    %p106 = scmp.eq.s32.totalorder %s17, 0
    %p107 = por %p105, %p106
    %s108 = ssub.s32 %s18, %s30
    %s109 = ssub.s32 %s19, %s26
    %s110 = sor.u32 %s108, %s109
    %p111 = scmp.eq.s32.totalorder %s110, 0
    %s113 = sadd.s32 %s112, 1
    %s114 = scalar_select %p111, %s112, %s113
    %p117 = pneg %p111
    %p118 = scmp.eq.s32.totalorder %s11, 1
    %p119 = por %p117, %p118
    %p120 = scmp.ne.s32.totalorder %s112, %s115
    %p121 = scmp.eq.s32.totalorder %s11, 0
    %p122 = por %p120, %p121
    %p123 = scmp.ne.s32.totalorder %s112, %s115
    %p124 = scmp.eq.s32.totalorder %s16, 1
    %p125 = por %p123, %p124
    %p126 = scmp.ne.s32.totalorder %s115, %s116
    %p127 = scmp.eq.s32.totalorder %s16, 0
    %p128 = por %p126, %p127
    %p129 = scmp.ne.s32.totalorder %s115, %s116
    %p130 = scmp.eq.s32.totalorder %s17, 1
    %p131 = por %p129, %p130
    %p133 = scmp.ne.s32.totalorder %s116, %s132
    %p134 = scmp.eq.s32.totalorder %s17, 0
    %p135 = por %p133, %p134
    %s136 = ssub.s32 %s18, %s30
    %s137 = ssub.s32 %s19, %s26
    %s138 = sor.u32 %s136, %s137
    %p139 = scmp.eq.s32.totalorder %s138, 0
    %s141 = sadd.s32 %s140, 1
    %s142 = scalar_select %p139, %s140, %s141
    %p145 = pneg %p139
    %p146 = scmp.eq.s32.totalorder %s11, 1
    %p147 = por %p145, %p146
    %p148 = scmp.ne.s32.totalorder %s140, %s143
    %p149 = scmp.eq.s32.totalorder %s11, 0
    %p150 = por %p148, %p149
    %p151 = scmp.ne.s32.totalorder %s140, %s143
    %p152 = scmp.eq.s32.totalorder %s16, 1
    %p153 = por %p151, %p152
    %p154 = scmp.ne.s32.totalorder %s143, %s144
    %p155 = scmp.eq.s32.totalorder %s16, 0
    %p156 = por %p154, %p155
    %p157 = scmp.ne.s32.totalorder %s143, %s144
    %p158 = scmp.eq.s32.totalorder %s17, 1
    %p159 = por %p157, %p158
    %p161 = scmp.ne.s32.totalorder %s144, %s160
    %p162 = scmp.eq.s32.totalorder %s17, 0
    %p163 = por %p161, %p162
    %p164 = scmp.le.s32.totalorder 1, %s11
    %p165 = scmp.lt.s32.totalorder %s11, 3
    %p166 = pnand %p164, %p165
    %p167 = pneg %p166
    // Predicated region
    $region9: #{tpu_custom_call.1} parent=5 // pred_check
      _
    $region10: #{tpu_custom_call.1} parent=5 // pred_check_branch
      %169 = sbr.rel (%p166) target = $region12
    $region11: #{tpu_custom_call.1} parent=5 // pred_region
      %s170 = ssub.s32 %s11, 1
      // Predicated region
      $region13: #{tpu_custom_call.1} parent=11 // pred_check
        %p171 = pneg %p72
      $region14: #{tpu_custom_call.1} parent=11 // pred_check_branch
        %173 = sbr.rel (%p171) target = $region16
      $region15: #{tpu_custom_call.1} parent=11 // pred_region
        _
      $region16: #{tpu_custom_call.1} parent=11 // pred_fallthru
        _
    $region12: #{tpu_custom_call.1} parent=5 // pred_fallthru
      _
    %p174 = scmp.lt.s32.totalorder %s11, 2
    // Predicated region
    $region17: #{tpu_custom_call.1} parent=5 // pred_check
      %p175 = pneg %p174
    $region18: #{tpu_custom_call.1} parent=5 // pred_check_branch
      %177 = sbr.rel (%p175) target = $region20
    $region19: #{tpu_custom_call.1} parent=5 // pred_region
      // Predicated region
      $region21: #{tpu_custom_call.1} parent=19 // pred_check
        %p178 = pneg %p45
      $region22: #{tpu_custom_call.1} parent=19 // pred_check_branch
        %180 = sbr.rel (%p178) target = $region24
      $region23: #{tpu_custom_call.1} parent=19 // pred_region
        %s181 = smul.u32 16, %s19
        %p182 = scmp.lt.s32.totalorder %s18, 1
        %s183 = scalar_select %p182, %s18, 1
        %p184 = scmp.lt.s32.totalorder %s181, 15
        %s185 = scalar_select %p184, %s181, 15
        %s186 = smul.addr %s183, 16
        %s187 = sadd.s32 %s185, %s186
        %s188 = smul.addr %s187, 8
        %s189 = scalar_lea.vmem %s0, %s188
        %s190 = smul.u32 16, %s19
      $region24: #{tpu_custom_call.1} parent=19 // pred_fallthru
        _
    $region20: #{tpu_custom_call.1} parent=5 // pred_fallthru
      _
    %p191 = scmp.le.s32.totalorder 1, %s11
    %p192 = scmp.lt.s32.totalorder %s11, 3
    %p193 = pnand %p191, %p192
    %p194 = pneg %p193
    // Predicated region
    $region25: #{tpu_custom_call.1} parent=5 // pred_check
      _
    $region26: #{tpu_custom_call.1} parent=5 // pred_check_branch
      %196 = sbr.rel (%p193) target = $region28
    $region27: #{tpu_custom_call.1} parent=5 // pred_region
      %s197 = ssub.s32 %s11, 1
      %s198 = smul.u32 16, %s21
      %p199 = scmp.lt.s32.totalorder %s20, 1
      %s200 = scalar_select %p199, %s20, 1
      %p201 = scmp.lt.s32.totalorder %s198, 15
      %s202 = scalar_select %p201, %s198, 15
      %s203 = smul.addr %s200, 16
      %s204 = sadd.s32 %s202, %s203
      %s205 = smul.addr %s204, 8
      %s206 = scalar_lea.vmem %s0, %s205
      %p207 = pneg %p51
      %p208 = pneg %p48
      %p209 = pneg %p72
      %p210 = pneg %p69
      %p211 = pneg %p100
      %p212 = pneg %p97
      %s213 = smul.u32 16, %s21
      %p214 = scmp.lt.s32.totalorder %s20, 1
      %s215 = scalar_select %p214, %s20, 1
      %p216 = scmp.lt.s32.totalorder %s213, 15
      %s217 = scalar_select %p216, %s213, 15
      %s218 = smul.addr %s215, 16
      %s219 = sadd.s32 %s217, %s218
      %s220 = smul.addr %s219, 8
      %s221 = scalar_lea.vmem %s2, %s220
      %p222 = pneg %p128
      %p223 = pneg %p125
      %s224 = smul.u32 16, %s21
      %p225 = scmp.lt.s32.totalorder %s20, 1
      %s226 = scalar_select %p225, %s20, 1
      %p227 = scmp.lt.s32.totalorder %s224, 15
      %s228 = scalar_select %p227, %s224, 15
      %s229 = smul.addr %s226, 16
      %s230 = sadd.s32 %s228, %s229
      %s231 = smul.addr %s230, 8
      %s232 = scalar_lea.vmem %s3, %s231
      %p233 = pneg %p156
      %p234 = pneg %p153
      %s235 = smul.u32 16, %s21
      %p236 = scmp.lt.s32.totalorder %s20, 1
      %s237 = scalar_select %p236, %s20, 1
      %p238 = scmp.lt.s32.totalorder %s235, 15
      %s239 = scalar_select %p238, %s235, 15
      %s240 = smul.addr %s237, 16
      %s241 = sadd.s32 %s239, %s240
      %s242 = smul.addr %s241, 8
      %s243 = scalar_lea.vmem %s4, %s242
      %s244 = smul.u32 16, %s21
      %p245 = scmp.lt.s32.totalorder %s20, 1
      %s246 = scalar_select %p245, %s20, 1
      %p247 = scmp.lt.s32.totalorder %s244, 15
      %s248 = scalar_select %p247, %s244, 15
      %s249 = smul.addr %s246, 16
      %s250 = sadd.s32 %s248, %s249
      %s251 = smul.addr %s250, 8
      %s252 = scalar_lea.vmem %s0, %s251
      %s253 = smul.u32 16, %s21
      %s254 = smul.u32 16, %s21
      %p255 = scmp.lt.s32.totalorder %s20, 1
      %s256 = scalar_select %p255, %s20, 1
      %p257 = scmp.lt.s32.totalorder %s254, 15
      %s258 = scalar_select %p257, %s254, 15
      %s259 = smul.addr %s256, 16
      %s260 = sadd.s32 %s258, %s259
      %s261 = smul.addr %s260, 8
      %s262 = scalar_lea.vmem %s2, %s261
      %s263 = smul.u32 16, %s21
      %s264 = smul.u32 16, %s21
      %p265 = scmp.lt.s32.totalorder %s20, 1
      %s266 = scalar_select %p265, %s20, 1
      %p267 = scmp.lt.s32.totalorder %s264, 15
      %s268 = scalar_select %p267, %s264, 15
      %s269 = smul.addr %s266, 16
      %s270 = sadd.s32 %s268, %s269
      %s271 = smul.addr %s270, 8
      %s272 = scalar_lea.vmem %s3, %s271
      %s273 = smul.u32 16, %s21
      %s274 = smul.u32 16, %s21
      %p275 = scmp.lt.s32.totalorder %s20, 1
      %s276 = scalar_select %p275, %s20, 1
      %p277 = scmp.lt.s32.totalorder %s274, 15
      %s278 = scalar_select %p277, %s274, 15
      %s279 = smul.addr %s276, 16
      %s280 = sadd.s32 %s278, %s279
      %s281 = smul.addr %s280, 8
      %s282 = scalar_lea.vmem %s4, %s281
      %s283 = smul.u32 16, %s21
      %v284 = vld [vmem:[%s252] sm:$0xff]
      %v285 = vld [vmem:[%s252 + $0x8] sm:$0xff]
      %v286 = vld [vmem:[%s252 + $0x10] sm:$0xff]
      %v287 = vld [vmem:[%s252 + $0x18] sm:$0xff]
      %v288 = vld [vmem:[%s252 + $0x20] sm:$0xff]
      %v289 = vld [vmem:[%s252 + $0x28] sm:$0xff]
      %v290 = vld [vmem:[%s252 + $0x30] sm:$0xff]
      %v291 = vld [vmem:[%s252 + $0x38] sm:$0xff]
      %v292 = vld [vmem:[%s252 + $0x40] sm:$0xff]
      %v293 = vld [vmem:[%s252 + $0x48] sm:$0xff]
      %v294 = vld [vmem:[%s252 + $0x50] sm:$0xff]
      %v295 = vld [vmem:[%s252 + $0x58] sm:$0xff]
      %v296 = vld [vmem:[%s252 + $0x60] sm:$0xff]
      %v297 = vld [vmem:[%s252 + $0x68] sm:$0xff]
      %v298 = vld [vmem:[%s252 + $0x70] sm:$0xff]
      %v299 = vld [vmem:[%s252 + $0x78] sm:$0xff]
      %v300 = vld [vmem:[%s1] sm:$0xff]
      %v301 = vld [vmem:[%s1 + $0x8] sm:$0xff]
      %v302 = vld [vmem:[%s1 + $0x10] sm:$0xff]
      %v303 = vld [vmem:[%s1 + $0x18] sm:$0xff]
      %vm304 = vcmask 261120
      %v306 = vsel %vm304, %v284, 0
      %v309 = vsel %vm304, %v285, 0
      %v312 = vsel %vm304, %v286, 0
      %v315 = vsel %vm304, %v287, 0
      %v318 = vsel %vm304, %v288, 0
      %v321 = vsel %vm304, %v289, 0
      %v324 = vsel %vm304, %v290, 0
      %v327 = vsel %vm304, %v291, 0
      %v330 = vsel %vm304, %v292, 0
      %v333 = vsel %vm304, %v293, 0
      %v336 = vsel %vm304, %v294, 0
      %v339 = vsel %vm304, %v295, 0
      %v342 = vsel %vm304, %v296, 0
      %v345 = vsel %vm304, %v297, 0
      %v348 = vsel %vm304, %v298, 0
      %v351 = vsel %vm304, %v299, 0
      %353 = vmatpush.msra.mxu0 0.0
      %354 = vmatpush.msra.mxu0 0.0
      %355 = vmatpush.msra.mxu0 0.0
      %356 = vmatpush.msra.mxu0 0.0
      %357 = vmatpush.msra.mxu0 0.0
      %358 = vmatpush.msra.mxu0 0.0
      %359 = vmatpush.msra.mxu0 0.0
      %360 = vmatpush.msra.mxu0 0.0
      %361 = vmatpush.msra.mxu0 0.0
      %362 = vmatpush.msra.mxu0 0.0
      %363 = vmatpush.msra.mxu0 0.0
      %364 = vmatpush.msra.mxu0 0.0
      %365 = vmatpush.msra.mxu0 %v303
      %366 = vmatpush.msra.mxu0 %v302
      %367 = vmatpush.msra.mxu0 %v301
      %368 = vmatpush.msra.mxu0 %v300
      %369 = vmatmul.f32.gmra.mxu0 %v306
      %v370 = vpop.f32.mrf.mxu0
      %v371 = vadd.f32 0.0, %v370
      %372 = vmatmul.f32.gmra.mxu0 %v309
      %v373 = vpop.f32.mrf.mxu0
      %v374 = vadd.f32 0.0, %v373
      %375 = vmatmul.f32.gmra.mxu0 %v312
      %v376 = vpop.f32.mrf.mxu0
      %v377 = vadd.f32 0.0, %v376
      %378 = vmatmul.f32.gmra.mxu0 %v315
      %v379 = vpop.f32.mrf.mxu0
      %v380 = vadd.f32 0.0, %v379
      %381 = vmatmul.f32.gmra.mxu0 %v318
      %v382 = vpop.f32.mrf.mxu0
      %v383 = vadd.f32 0.0, %v382
      %384 = vmatmul.f32.gmra.mxu0 %v321
      %v385 = vpop.f32.mrf.mxu0
      %v386 = vadd.f32 0.0, %v385
      %387 = vmatmul.f32.gmra.mxu0 %v324
      %v388 = vpop.f32.mrf.mxu0
      %v389 = vadd.f32 0.0, %v388
      %390 = vmatmul.f32.gmra.mxu0 %v327
      %v391 = vpop.f32.mrf.mxu0
      %v392 = vadd.f32 0.0, %v391
      %393 = vmatmul.f32.gmra.mxu0 %v330
      %v394 = vpop.f32.mrf.mxu0
      %v395 = vadd.f32 0.0, %v394
      %396 = vmatmul.f32.gmra.mxu0 %v333
      %v397 = vpop.f32.mrf.mxu0
      %v398 = vadd.f32 0.0, %v397
      %399 = vmatmul.f32.gmra.mxu0 %v336
      %v400 = vpop.f32.mrf.mxu0
      %v401 = vadd.f32 0.0, %v400
      %402 = vmatmul.f32.gmra.mxu0 %v339
      %v403 = vpop.f32.mrf.mxu0
      %v404 = vadd.f32 0.0, %v403
      %405 = vmatmul.f32.gmra.mxu0 %v342
      %v406 = vpop.f32.mrf.mxu0
      %v407 = vadd.f32 0.0, %v406
      %408 = vmatmul.f32.gmra.mxu0 %v345
      %v409 = vpop.f32.mrf.mxu0
      %v410 = vadd.f32 0.0, %v409
      %411 = vmatmul.f32.gmra.mxu0 %v348
      %v412 = vpop.f32.mrf.mxu0
      %v413 = vadd.f32 0.0, %v412
      %414 = vmatmul.f32.gmra.mxu0 %v351
      %v415 = vpop.f32.mrf.mxu0
      %v416 = vadd.f32 0.0, %v415
      %417 = vdwg.mxu0
      %418 = vst.msk [vmem:[%s262] sm:$0xff] %vm304, %v371
      %419 = vst.msk [vmem:[%s262 + $0x8] sm:$0xff] %vm304, %v374
      %420 = vst.msk [vmem:[%s262 + $0x10] sm:$0xff] %vm304, %v377
      %421 = vst.msk [vmem:[%s262 + $0x18] sm:$0xff] %vm304, %v380
      %422 = vst.msk [vmem:[%s262 + $0x20] sm:$0xff] %vm304, %v383
      %423 = vst.msk [vmem:[%s262 + $0x28] sm:$0xff] %vm304, %v386
      %424 = vst.msk [vmem:[%s262 + $0x30] sm:$0xff] %vm304, %v389
      %425 = vst.msk [vmem:[%s262 + $0x38] sm:$0xff] %vm304, %v392
      %426 = vst.msk [vmem:[%s262 + $0x40] sm:$0xff] %vm304, %v395
      %427 = vst.msk [vmem:[%s262 + $0x48] sm:$0xff] %vm304, %v398
      %428 = vst.msk [vmem:[%s262 + $0x50] sm:$0xff] %vm304, %v401
      %429 = vst.msk [vmem:[%s262 + $0x58] sm:$0xff] %vm304, %v404
      %430 = vst.msk [vmem:[%s262 + $0x60] sm:$0xff] %vm304, %v407
      %431 = vst.msk [vmem:[%s262 + $0x68] sm:$0xff] %vm304, %v410
      %432 = vst.msk [vmem:[%s262 + $0x70] sm:$0xff] %vm304, %v413
      %433 = vst.msk [vmem:[%s262 + $0x78] sm:$0xff] %vm304, %v416
      %450 = vrot.lane.b32.xlu0 %v371, 96
      %v451 = vpop.permute.xlu0 %450
      %452 = vrot.lane.b32.xlu0 %v374, 96
      %v453 = vpop.permute.xlu0 %452
      %454 = vrot.lane.b32.xlu0 %v377, 96
      %v455 = vpop.permute.xlu0 %454
      %456 = vrot.lane.b32.xlu0 %v380, 96
      %v457 = vpop.permute.xlu0 %456
      %458 = vrot.lane.b32.xlu0 %v383, 96
      %v459 = vpop.permute.xlu0 %458
      %460 = vrot.lane.b32.xlu0 %v386, 96
      %v461 = vpop.permute.xlu0 %460
      %462 = vrot.lane.b32.xlu0 %v389, 96
      %v463 = vpop.permute.xlu0 %462
      %464 = vrot.lane.b32.xlu0 %v392, 96
      %v465 = vpop.permute.xlu0 %464
      %466 = vrot.lane.b32.xlu0 %v395, 96
      %v467 = vpop.permute.xlu0 %466
      %468 = vrot.lane.b32.xlu0 %v398, 96
      %v469 = vpop.permute.xlu0 %468
      %470 = vrot.lane.b32.xlu0 %v401, 96
      %v471 = vpop.permute.xlu0 %470
      %472 = vrot.lane.b32.xlu0 %v404, 96
      %v473 = vpop.permute.xlu0 %472
      %474 = vrot.lane.b32.xlu0 %v407, 96
      %v475 = vpop.permute.xlu0 %474
      %476 = vrot.lane.b32.xlu0 %v410, 96
      %v477 = vpop.permute.xlu0 %476
      %478 = vrot.lane.b32.xlu0 %v413, 96
      %v479 = vpop.permute.xlu0 %478
      %480 = vrot.lane.b32.xlu0 %v416, 96
      %v481 = vpop.permute.xlu0 %480
      %498 = vst.msk [vmem:[%s272] sm:$0xff] %vm304, %v451
      %499 = vst.msk [vmem:[%s272 + $0x8] sm:$0xff] %vm304, %v453
      %500 = vst.msk [vmem:[%s272 + $0x10] sm:$0xff] %vm304, %v455
      %501 = vst.msk [vmem:[%s272 + $0x18] sm:$0xff] %vm304, %v457
      %502 = vst.msk [vmem:[%s272 + $0x20] sm:$0xff] %vm304, %v459
      %503 = vst.msk [vmem:[%s272 + $0x28] sm:$0xff] %vm304, %v461
      %504 = vst.msk [vmem:[%s272 + $0x30] sm:$0xff] %vm304, %v463
      %505 = vst.msk [vmem:[%s272 + $0x38] sm:$0xff] %vm304, %v465
      %506 = vst.msk [vmem:[%s272 + $0x40] sm:$0xff] %vm304, %v467
      %507 = vst.msk [vmem:[%s272 + $0x48] sm:$0xff] %vm304, %v469
      %508 = vst.msk [vmem:[%s272 + $0x50] sm:$0xff] %vm304, %v471
      %509 = vst.msk [vmem:[%s272 + $0x58] sm:$0xff] %vm304, %v473
      %510 = vst.msk [vmem:[%s272 + $0x60] sm:$0xff] %vm304, %v475
      %511 = vst.msk [vmem:[%s272 + $0x68] sm:$0xff] %vm304, %v477
      %512 = vst.msk [vmem:[%s272 + $0x70] sm:$0xff] %vm304, %v479
      %513 = vst.msk [vmem:[%s272 + $0x78] sm:$0xff] %vm304, %v481
      %514 = vrot.lane.b32.xlu0 %v371, 64
      %v515 = vpop.permute.xlu0 %514
      %516 = vrot.lane.b32.xlu0 %v374, 64
      %v517 = vpop.permute.xlu0 %516
      %518 = vrot.lane.b32.xlu0 %v377, 64
      %v519 = vpop.permute.xlu0 %518
      %520 = vrot.lane.b32.xlu0 %v380, 64
      %v521 = vpop.permute.xlu0 %520
      %522 = vrot.lane.b32.xlu0 %v383, 64
      %v523 = vpop.permute.xlu0 %522
      %524 = vrot.lane.b32.xlu0 %v386, 64
      %v525 = vpop.permute.xlu0 %524
      %526 = vrot.lane.b32.xlu0 %v389, 64
      %v527 = vpop.permute.xlu0 %526
      %528 = vrot.lane.b32.xlu0 %v392, 64
      %v529 = vpop.permute.xlu0 %528
      %530 = vrot.lane.b32.xlu0 %v395, 64
      %v531 = vpop.permute.xlu0 %530
      %532 = vrot.lane.b32.xlu0 %v398, 64
      %v533 = vpop.permute.xlu0 %532
      %534 = vrot.lane.b32.xlu0 %v401, 64
      %v535 = vpop.permute.xlu0 %534
      %536 = vrot.lane.b32.xlu0 %v404, 64
      %v537 = vpop.permute.xlu0 %536
      %538 = vrot.lane.b32.xlu0 %v407, 64
      %v539 = vpop.permute.xlu0 %538
      %540 = vrot.lane.b32.xlu0 %v410, 64
      %v541 = vpop.permute.xlu0 %540
      %542 = vrot.lane.b32.xlu0 %v413, 64
      %v543 = vpop.permute.xlu0 %542
      %544 = vrot.lane.b32.xlu0 %v416, 64
      %v545 = vpop.permute.xlu0 %544
      %562 = vst.msk [vmem:[%s282] sm:$0xff] %vm304, %v515
      %563 = vst.msk [vmem:[%s282 + $0x8] sm:$0xff] %vm304, %v517
      %564 = vst.msk [vmem:[%s282 + $0x10] sm:$0xff] %vm304, %v519
      %565 = vst.msk [vmem:[%s282 + $0x18] sm:$0xff] %vm304, %v521
      %566 = vst.msk [vmem:[%s282 + $0x20] sm:$0xff] %vm304, %v523
      %567 = vst.msk [vmem:[%s282 + $0x28] sm:$0xff] %vm304, %v525
      %568 = vst.msk [vmem:[%s282 + $0x30] sm:$0xff] %vm304, %v527
      %569 = vst.msk [vmem:[%s282 + $0x38] sm:$0xff] %vm304, %v529
      %570 = vst.msk [vmem:[%s282 + $0x40] sm:$0xff] %vm304, %v531
      %571 = vst.msk [vmem:[%s282 + $0x48] sm:$0xff] %vm304, %v533
      %572 = vst.msk [vmem:[%s282 + $0x50] sm:$0xff] %vm304, %v535
      %573 = vst.msk [vmem:[%s282 + $0x58] sm:$0xff] %vm304, %v537
      %574 = vst.msk [vmem:[%s282 + $0x60] sm:$0xff] %vm304, %v539
      %575 = vst.msk [vmem:[%s282 + $0x68] sm:$0xff] %vm304, %v541
      %576 = vst.msk [vmem:[%s282 + $0x70] sm:$0xff] %vm304, %v543
      %577 = vst.msk [vmem:[%s282 + $0x78] sm:$0xff] %vm304, %v545
      %s578 = smul.u32 16, %s21
      %p579 = scmp.lt.s32.totalorder %s20, 1
      %s580 = scalar_select %p579, %s20, 1
      %p581 = scmp.lt.s32.totalorder %s578, 15
      %s582 = scalar_select %p581, %s578, 15
      %s583 = smul.addr %s580, 16
      %s584 = sadd.s32 %s582, %s583
      %s585 = smul.addr %s584, 8
      %s586 = scalar_lea.vmem %s2, %s585
      %s587 = smul.u32 16, %s21
      %p588 = scmp.lt.s32.totalorder %s20, 1
      %s589 = scalar_select %p588, %s20, 1
      %p590 = scmp.lt.s32.totalorder %s587, 15
      %s591 = scalar_select %p590, %s587, 15
      %s592 = smul.addr %s589, 16
      %s593 = sadd.s32 %s591, %s592
      %s594 = smul.addr %s593, 8
      %s595 = scalar_lea.vmem %s3, %s594
      %s596 = smul.u32 16, %s21
      %p597 = scmp.lt.s32.totalorder %s20, 1
      %s598 = scalar_select %p597, %s20, 1
      %p599 = scmp.lt.s32.totalorder %s596, 15
      %s600 = scalar_select %p599, %s596, 15
      %s601 = smul.addr %s598, 16
      %s602 = sadd.s32 %s600, %s601
      %s603 = smul.addr %s602, 8
      %s604 = scalar_lea.vmem %s4, %s603
      // Predicated region
      $region29: #{tpu_custom_call.1} parent=27 // pred_check
        %p605 = pneg %p97
      $region30: #{tpu_custom_call.1} parent=27 // pred_check_branch
        %607 = sbr.rel (%p605) target = $region32
      $region31: #{tpu_custom_call.1} parent=27 // pred_region
        %s608 = smul.u32 16, %s21
      $region32: #{tpu_custom_call.1} parent=27 // pred_fallthru
        _
      // Predicated region
      $region33: #{tpu_custom_call.1} parent=27 // pred_check
        %p609 = pneg %p125
      $region34: #{tpu_custom_call.1} parent=27 // pred_check_branch
        %611 = sbr.rel (%p609) target = $region36
      $region35: #{tpu_custom_call.1} parent=27 // pred_region
        %s612 = smul.u32 16, %s21
      $region36: #{tpu_custom_call.1} parent=27 // pred_fallthru
        _
      // Predicated region
      $region37: #{tpu_custom_call.1} parent=27 // pred_check
        %p613 = pneg %p153
      $region38: #{tpu_custom_call.1} parent=27 // pred_check_branch
        %615 = sbr.rel (%p613) target = $region40
      $region39: #{tpu_custom_call.1} parent=27 // pred_region
        %s616 = smul.u32 16, %s21
      $region40: #{tpu_custom_call.1} parent=27 // pred_fallthru
        _
    $region28: #{tpu_custom_call.1} parent=5 // pred_fallthru
      _
    %p617 = scmp.le.s32.totalorder 2, %s11
    // Predicated region
    $region41: #{tpu_custom_call.1} parent=5 // pred_check
      %p618 = pneg %p617
    $region42: #{tpu_custom_call.1} parent=5 // pred_check_branch
      %620 = sbr.rel (%p618) target = $region44
    $region43: #{tpu_custom_call.1} parent=5 // pred_region
      %s621 = ssub.s32 %s11, 2
      // Predicated region
      $region45: #{tpu_custom_call.1} parent=43 // pred_check
        %p622 = pneg %p103
      $region46: #{tpu_custom_call.1} parent=43 // pred_check_branch
        %624 = sbr.rel (%p622) target = $region48
      $region47: #{tpu_custom_call.1} parent=43 // pred_region
        %s625 = smul.u32 16, %s23
        %p626 = scmp.lt.s32.totalorder %s22, 1
        %s627 = scalar_select %p626, %s22, 1
        %p628 = scmp.lt.s32.totalorder %s625, 15
        %s629 = scalar_select %p628, %s625, 15
        %s630 = smul.addr %s627, 16
        %s631 = sadd.s32 %s629, %s630
        %s632 = smul.addr %s631, 8
        %s633 = scalar_lea.vmem %s2, %s632
      $region48: #{tpu_custom_call.1} parent=43 // pred_fallthru
        _
      // Predicated region
      $region49: #{tpu_custom_call.1} parent=43 // pred_check
        %p634 = pneg %p131
      $region50: #{tpu_custom_call.1} parent=43 // pred_check_branch
        %636 = sbr.rel (%p634) target = $region52
      $region51: #{tpu_custom_call.1} parent=43 // pred_region
        %s637 = smul.u32 16, %s23
        %p638 = scmp.lt.s32.totalorder %s22, 1
        %s639 = scalar_select %p638, %s22, 1
        %p640 = scmp.lt.s32.totalorder %s637, 15
        %s641 = scalar_select %p640, %s637, 15
        %s642 = smul.addr %s639, 16
        %s643 = sadd.s32 %s641, %s642
        %s644 = smul.addr %s643, 8
        %s645 = scalar_lea.vmem %s3, %s644
      $region52: #{tpu_custom_call.1} parent=43 // pred_fallthru
        _
      // Predicated region
      $region53: #{tpu_custom_call.1} parent=43 // pred_check
        %p646 = pneg %p159
      $region54: #{tpu_custom_call.1} parent=43 // pred_check_branch
        %648 = sbr.rel (%p646) target = $region56
      $region55: #{tpu_custom_call.1} parent=43 // pred_region
        %s649 = smul.u32 16, %s23
        %p650 = scmp.lt.s32.totalorder %s22, 1
        %s651 = scalar_select %p650, %s22, 1
        %p652 = scmp.lt.s32.totalorder %s649, 15
        %s653 = scalar_select %p652, %s649, 15
        %s654 = smul.addr %s651, 16
        %s655 = sadd.s32 %s653, %s654
        %s656 = smul.addr %s655, 8
        %s657 = scalar_lea.vmem %s4, %s656
      $region56: #{tpu_custom_call.1} parent=43 // pred_fallthru
        _
    $region44: #{tpu_custom_call.1} parent=5 // pred_fallthru
      _
  $region6: #{tpu_custom_call.1} parent=0 // loop_footer
    %s15 = sadd.s32 1, %s11
  $region7: #{tpu_custom_call.1} parent=0 // loop_footer_branch
    %10 = sbr.rel target = $region3
  $region8: #{tpu_custom_call.1} parent=0 // loop_exit
    _

</llo_original>
